<compile_context>
chip_gen: v7x
topology: tpu7x:2x2x1
jax: 0.10.0
libtpu: 0.0.40
codegen_flags: <defaults>
</compile_context>

<pallas_src>
import jax
import jax.numpy as jnp
from jax.experimental import pallas as pl
from jax.experimental.pallas import tpu as pltpu

_LANE = 128
_TILE_BYTES = 2 << 20          # ~2 MiB of tensor data per block


def _sublane_multiple(dtype):
    """Second-minor tiling multiple: 8 for 32-bit, 16 for bf16, 32 for 8-bit."""
    return max(8, 8 * (4 // jnp.dtype(dtype).itemsize))


def _pick_block_rows(rows, dtype):
    mult = _sublane_multiple(dtype)
    itemsize = jnp.dtype(dtype).itemsize
    target = max(mult, (_TILE_BYTES // (_LANE * itemsize)) // mult * mult)
    if rows < 4 * mult:
        # Small input: one full-dim block (block_shape == array dims is always legal).
        return rows
    # Keep >= 4 grid steps when the input is big enough (megacore + pipelining),
    # otherwise use the ~2 MiB target tile.
    return max(mult, min(target, (rows // 4) // mult * mult))


def _megact_kernel(s_ref, x_ref, o_ref):
    # s_ref: SMEM (4,) f32 folded scalars [p0/5, p1/5, (p2 - p3)/5, p4/5]
    x = x_ref[...].astype(jnp.float32)                 # native-dtype load, f32 compute
    sig = jnp.tanh(x * 0.5) * 0.5 + 0.5                # sigmoid via one EUP tanh (no VPU divide)
    y = (sig * (x * s_ref[0] + s_ref[1])               # swish + sigmoid terms
         + x * s_ref[2]                                # linear - neg collapsed
         + jnp.sin(x) * s_ref[3])                      # sin (EUP)
    o_ref[...] = y.astype(o_ref.dtype)                 # native-dtype store


@jax.jit
def megactivation(x, raw_params):
    """y = (swish*p0 + sigmoid*p1 + x*p2 + (-x)*p3 + sin*p4) / len(p), p = softmax(raw_params)."""
    p = jax.nn.softmax(raw_params.astype(jnp.float32))
    inv_n = 1.0 / raw_params.shape[0]                  # torch: y / len(params)
    # Fold constants: swish & sigmoid share the sigmoid factor, linear & neg
    # collapse to x*(p2 - p3), everything pre-scaled by 1/len(params).
    s = jnp.stack([p[0], p[1], p[2] - p[3], p[4]]) * inv_n

    orig_shape = x.shape
    if not jnp.issubdtype(x.dtype, jnp.floating):
        x = x.astype(jnp.float32)                      # guard: activation defined on floats
    io_dtype = x.dtype

    total = x.size
    flat = x.reshape(-1)
    rem = total % _LANE
    if rem:
        # TODO(synk): sub-128-element lane tail; this tiny pad costs one extra copy
        # only for non-lane-aligned sizes (rare for activation tensors).
        flat = jnp.pad(flat, (0, _LANE - rem))
    rows = flat.size // _LANE
    x2d = flat.reshape(rows, _LANE)                    # lane-dense view; bitcast when rem == 0

    block_rows = _pick_block_rows(rows, io_dtype)

    out2d = pl.pallas_call(
        _megact_kernel,
        grid=(pl.cdiv(rows, block_rows),),
        in_specs=[pl.BlockSpec(memory_space=pltpu.MemorySpace.SMEM),     # folded scalars
                  pl.BlockSpec((block_rows, _LANE), lambda i: (i, 0))],
        out_specs=pl.BlockSpec((block_rows, _LANE), lambda i: (i, 0)),
        out_shape=jax.ShapeDtypeStruct((rows, _LANE), io_dtype),
        compiler_params=pltpu.CompilerParams(
            dimension_semantics=("parallel",)),
    )(s, x2d)

    out = out2d.reshape(-1)
    if rem:
        out = out[:total]
    return out.reshape(orig_shape)


def megactivation_ref(x, raw_params):
    """Pure-JAX reference matching the PyTorch module exactly."""
    p = jax.nn.softmax(raw_params.astype(jnp.float32))
    xf = x.astype(jnp.float32)
    sig = jax.nn.sigmoid(xf)
    y = sig * xf * p[0] + sig * p[1] + xf * p[2] + (-xf) * p[3] + jnp.sin(xf) * p[4]
    return y / raw_params.shape[0]


if __name__ == "__main__":
    key = jax.random.PRNGKey(0)
    k_x, k_p = jax.random.split(key)

    x = jax.random.normal(k_x, (2, 4, 16, 16), jnp.float32)
    # torch init is zeros(5); use non-trivial params so all branches are exercised.
    params = jax.random.normal(k_p, (5,), jnp.float32)

    y = jax.block_until_ready(megactivation(x, params))
    assert y.shape == x.shape and y.dtype == x.dtype
    assert bool(jnp.all(jnp.isfinite(y)))
    y_ref = megactivation_ref(x, params)
    assert bool(jnp.allclose(y, y_ref, atol=1e-5, rtol=1e-5)), \
        float(jnp.max(jnp.abs(y - y_ref)))

    # torch-default zero-params case (uniform softmax).
    y0 = jax.block_until_ready(megactivation(x, jnp.zeros((5,), jnp.float32)))
    y0_ref = megactivation_ref(x, jnp.zeros((5,), jnp.float32))
    assert bool(jnp.allclose(y0, y0_ref, atol=1e-5, rtol=1e-5))

    # bf16 input: native-dtype HBM streaming, f32 compute inside the kernel.
    xb = x.astype(jnp.bfloat16)
    yb = jax.block_until_ready(megactivation(xb, params))
    assert yb.dtype == jnp.bfloat16
    assert bool(jnp.allclose(yb.astype(jnp.float32), megactivation_ref(xb, params),
                             atol=2e-2, rtol=2e-2))

    # Multi-block path with a partial (masked) boundary block: rows=200, block=48.
    x3 = jax.random.normal(k_x, (100, 256), jnp.float32)
    y3 = jax.block_until_ready(megactivation(x3, params))
    assert bool(jnp.allclose(y3, megactivation_ref(x3, params), atol=1e-5, rtol=1e-5))

    # Non-lane-aligned total (105 elements) exercises the tiny tail-pad path.
    x4 = jax.random.normal(k_x, (3, 5, 7), jnp.float32)
    y4 = jax.block_until_ready(megactivation(x4, params))
    assert bool(jnp.allclose(y4, megactivation_ref(x4, params), atol=1e-5, rtol=1e-5))

    print("KERNEL_OK")
</pallas_src>

<mosaic_0001>
module attributes {stable_mosaic.version = 11 : i64} {
  func.func @_megact_kernel(%arg0: i32, %arg1: memref<4xf32, #tpu.memory_space<smem>>, %arg2: memref<16x128xf32, #tpu.memory_space<vmem>>, %arg3: memref<16x128xf32, #tpu.memory_space<vmem>>) attributes {dimension_semantics = [#tpu.dimension_semantics<parallel>], iteration_bounds = array<i64: 1>, scalar_prefetch = 0 : i64, scratch_operands = 0 : i64, tpu.core_type = #tpu.core_type<tc>, window_params = [{transform_indices = @transform_0, window_bounds = array<i64: 4>}, {transform_indices = @transform_1, window_bounds = array<i64: 16, 128>}, {transform_indices = @transform_2, window_bounds = array<i64: 16, 128>}]} {
    %c0 = arith.constant 0 : index
    %c0_0 = arith.constant 0 : index
    %0 = vector.load %arg2[%c0, %c0_0] : memref<16x128xf32, #tpu.memory_space<vmem>>, vector<16x128xf32>
    %cst = arith.constant 5.000000e-01 : f32
    %1 = vector.broadcast %cst : f32 to vector<16x128xf32>
    %2 = arith.mulf %0, %1 : vector<16x128xf32>
    %3 = math.tanh %2 : vector<16x128xf32>
    %cst_1 = arith.constant 5.000000e-01 : f32
    %4 = vector.broadcast %cst_1 : f32 to vector<16x128xf32>
    %5 = arith.mulf %3, %4 : vector<16x128xf32>
    %cst_2 = arith.constant 5.000000e-01 : f32
    %6 = vector.broadcast %cst_2 : f32 to vector<16x128xf32>
    %7 = arith.addf %5, %6 : vector<16x128xf32>
    %c0_3 = arith.constant 0 : index
    %8 = memref.load %arg1[%c0_3] : memref<4xf32, #tpu.memory_space<smem>>
    %9 = vector.broadcast %8 : f32 to vector<16x128xf32>
    %10 = arith.mulf %0, %9 : vector<16x128xf32>
    %c1 = arith.constant 1 : index
    %11 = memref.load %arg1[%c1] : memref<4xf32, #tpu.memory_space<smem>>
    %12 = vector.broadcast %11 : f32 to vector<16x128xf32>
    %13 = arith.addf %10, %12 : vector<16x128xf32>
    %14 = arith.mulf %7, %13 : vector<16x128xf32>
    %c2 = arith.constant 2 : index
    %15 = memref.load %arg1[%c2] : memref<4xf32, #tpu.memory_space<smem>>
    %16 = vector.broadcast %15 : f32 to vector<16x128xf32>
    %17 = arith.mulf %0, %16 : vector<16x128xf32>
    %18 = arith.addf %14, %17 : vector<16x128xf32>
    %19 = math.sin %0 : vector<16x128xf32>
    %c3 = arith.constant 3 : index
    %20 = memref.load %arg1[%c3] : memref<4xf32, #tpu.memory_space<smem>>
    %21 = vector.broadcast %20 : f32 to vector<16x128xf32>
    %22 = arith.mulf %19, %21 : vector<16x128xf32>
    %23 = arith.addf %18, %22 : vector<16x128xf32>
    %c0_4 = arith.constant 0 : index
    %c0_5 = arith.constant 0 : index
    %24 = vector.load %arg3[%c0_4, %c0_5] : memref<16x128xf32, #tpu.memory_space<vmem>>, vector<16x128xf32>
    tpu.vector_store %arg3[%c0_4, %c0_5], %23 {strides = array<i32>} : memref<16x128xf32, #tpu.memory_space<vmem>>, vector<16x128xf32>,
    return
  }
  func.func @transform_0(%arg0: i32) -> i32 {
    %c0_i32 = arith.constant 0 : i32
    %c0_i32_0 = arith.constant 0 : i32
    return %c0_i32 : i32
  }
  func.func @transform_1(%arg0: i32) -> (i32, i32) {
    %c0_i32 = arith.constant 0 : i32
    %c0_i32_0 = arith.constant 0 : i32
    return %arg0, %c0_i32 : i32, i32
  }
  func.func @transform_2(%arg0: i32) -> (i32, i32) {
    %c0_i32 = arith.constant 0 : i32
    %c0_i32_0 = arith.constant 0 : i32
    return %arg0, %c0_i32 : i32, i32
  }
}

</mosaic_0001>

<llo_original>
// kernel: megactivation.1
$region0: #{megactivation.1}
  #allocation0 [shape = 'u32[]', space=smem, size = 0x4, offset = 0x4, fixed_abs, tag = 'smem constant byte address 0x4 - core index']
  #allocation1 [shape = 'u32[144,128]{1,0:T(1,128)}', space=vmem, size = 0x12000, scoped, tag = 'internal scratch']
  %s0 = inlined_call_operand.vmem [shape: f32[4], index: 0, kind: input, shape index: {}]
  %s1 = inlined_call_operand.vmem [shape: f32[16,128], index: 1, kind: input, shape index: {}]
  %s2 = inlined_call_operand.vmem [shape: f32[16,128], index: 2, kind: output, shape index: {}]
  %s3 = sld [smem:[#allocation0]]
  $region22: #{megactivation.1} parent=0
    _
  %s5 = ssub.s32 1, %s3
  %s6 = scalar_select 0, %s5, %s3
  $region1: #{megactivation.1} parent=0
    #allocation2 [shape = 'u8[512]{0}', space=smem, size = 0x200, scoped, tag = 'input window, operand 0, single buffered']
    #allocation3 [shape = 's32[1]{0}', space=sflag, size = 0x4, scoped, tag = 'scoped memory for megactivation.1']
    %7 = vsyncpa [#allocation3], 0
    // Predicated region
    $region2: #{megactivation.1} parent=1 // pred_check
      _
    $region3: #{megactivation.1} parent=1 // pred_check_branch
      %9 = sbr.rel (0) target = $region5
    $region4: #{megactivation.1} parent=1 // pred_region
      %s11 = ssub.s32 16, 16
      %12 = vsyncadd [#allocation3], %s11
      %s14 = sshll.u32 %s0, 4
      %s15 = int_to_ptr.vmem [resolvable:$true] %s14
      %17 = dma.vmem_to_smem %s15, 16, [#allocation2], [#allocation3]
    $region5: #{megactivation.1} parent=1 // pred_fallthru
      _
    // Predicated region
    $region6: #{megactivation.1} parent=1 // pred_check
      _
    $region7: #{megactivation.1} parent=1 // pred_check_branch
      %19 = sbr.rel (0) target = $region9
    $region8: #{megactivation.1} parent=1 // pred_region
      _
    $region9: #{megactivation.1} parent=1 // pred_fallthru
      _
    // Predicated region
    $region10: #{megactivation.1} parent=1 // pred_check
      _
    $region11: #{megactivation.1} parent=1 // pred_check_branch
      %21 = sbr.rel (0) target = $region13
    $region12: #{megactivation.1} parent=1 // pred_region
      %22 = dma.done [#allocation3], 16
    $region13: #{megactivation.1} parent=1 // pred_fallthru
      _
    %23 = sfence
    %v24 = vld [vmem:[%s1] sm:$0xff]
    %v25 = vld [vmem:[%s1 + $0x8] sm:$0xff]
    %v26 = vmul.f32 %v24, 0.5
    %v27 = vmul.f32 %v25, 0.5
    %v28 = vtanh.pop %v26
    %v29 = vtanh.pop %v27
    %v30 = vmul.f32 %v28, 0.5
    %v31 = vmul.f32 %v29, 0.5
    %v32 = vadd.f32 %v30, 0.5
    %v33 = vadd.f32 %v31, 0.5
    %s34 = sld [smem:[#allocation2]]
    %v35 = vstv %s34
    %v36 = vmul.f32 %v24, %v35
    %v37 = vmul.f32 %v25, %v35
    %s38 = sld [smem:[#allocation2 + $0x1]]
    %v39 = vstv %s38
    %v40 = vadd.f32 %v36, %v39
    %v41 = vadd.f32 %v37, %v39
    %v42 = vmul.f32 %v32, %v40
    %v43 = vmul.f32 %v33, %v41
    %s44 = sld [smem:[#allocation2 + $0x2]]
    %v45 = vstv %s44
    %v46 = vmul.f32 %v24, %v45
    %v47 = vmul.f32 %v25, %v45
    %v48 = vadd.f32 %v42, %v46
    %v49 = vadd.f32 %v43, %v47
    %v50 = vand.u32 2147483647, %v24
    %vm51 = vcmp.le.f32.partialorder %v50, 0.7853982
    %vm52 = vcmp.lt.s32.totalorder %v24, 0
    %v53 = vand.u32 %v24, 2139095040
    %v54 = vshrl.u32 %v53, 23
    %v55 = vsub.s32 %v54, 127
    %v56 = vand.u32 2147483647, %v24
    %v57 = vand.u32 %v56, 8388607
    %v58 = vor.u32 %v57, 8388608
    %v59 = vsub.s32 0, %v58
    %v60 = vadd.s32 %v55, 1
    %vm61 = vcmp.gt.s32.totalorder %v60, 0
    %v62 = vsel %vm61, %v60, 0
    %v63 = vshrl.u32 %v62, 5
    %v64 = vand.u32 %v62, 31
    %v65 = vsub.s32 32, %v64
    %v66 = vshrl.u32 683565275, %v65
    %v67 = vshll.u32 683565275, %v64
    %v68 = vshrl.u32 2475754826, %v65
    %v69 = vor.u32 %v67, %v68
    %v70 = vshll.u32 2475754826, %v64
    %v71 = vshrl.u32 2131351028, %v65
    %v72 = vor.u32 %v70, %v71
    %v73 = vshll.u32 2131351028, %v64
    %v74 = vshrl.u32 2102212464, %v65
    %v75 = vor.u32 %v73, %v74
    %v76 = vshll.u32 2102212464, %v64
    %v77 = vshrl.u32 920167782, %v65
    %v78 = vor.u32 %v76, %v77
    %v79 = vshll.u32 920167782, %v64
    %v80 = vshrl.u32 1326507024, %v65
    %v81 = vor.u32 %v79, %v80
    %vm82 = vcmp.lt.s32.totalorder %v63, 1
    %vm83 = vcmp.lt.s32.totalorder %v63, 2
    %vm84 = vcmp.lt.s32.totalorder %v63, 3
    %vm85 = vcmp.lt.s32.totalorder %v63, 4
    %v86 = vsel %vm82, %v66, %v69
    %v87 = vsel %vm85, %v75, 2102212464
    %v88 = vsel %vm84, %v72, %v87
    %v89 = vsel %vm83, %v86, %v88
    %v90 = vsel %vm82, %v69, %v72
    %v91 = vsel %vm85, %v78, 920167782
    %v92 = vsel %vm84, %v75, %v91
    %v93 = vsel %vm83, %v90, %v92
    %v94 = vsel %vm82, %v72, %v75
    %v95 = vsel %vm85, %v81, 1326507024
    %v96 = vsel %vm84, %v78, %v95
    %v97 = vsel %vm83, %v94, %v96
    %v98 = vshll.u32 %v58, 8
    %v99 = vmul.u32.u64.compose %v98, %v97
    %v100 = vextract.low.u32 %v99
    %v101 = vextract.high.u32 %v99
    %v102 = vmul.u32.u64.compose %v98, %v93
    %v103 = vextract.low.u32 %v102
    %v104 = vextract.high.u32 %v102
    %v105 = vmul.u32 %v98, %v89
    %v106 = vadd.s32 %v101, %v103
    %vm107 = vc.u32 %v101, %v103
    %v108 = vadd.s32 %v104, 1
    %v109 = vsel %vm107, %v108, %v104
    %v110 = vadd.s32 %v105, %v109
    %v111 = vadd.s32 %v110, 536870912
    %v112 = vshrl.u32 %v111, 30
    %v113 = vshll.u32 %v112, 30
    %v114 = vsub.s32 %v110, %v113
    %vm115 = vcmp.lt.s32.totalorder %v114, 0
    %v116 = vsub.s32 0, %v114
    %v117 = vsel %vm115, %v116, %v114
    %v118 = vclz %v117
    %v119 = vsub.s32 %v118, 2
    %vm120 = vcmp.gt.s32.totalorder 0, %v119
    %v121 = vsel %vm120, 0, %v119
    %v122 = vsub.s32 32, %v121
    %v123 = vshll.u32 %v114, %v121
    %v124 = vshrl.u32 %v106, %v122
    %v125 = vor.u32 %v123, %v124
    %v126 = vsub.s32 4294967266, %v121
    %v127 = vadd.s32 %v126, 127
    %v128 = vshll.u32 %v127, 23
    %v129 = vor.u32 4788187, %v128
    %v130 = vand.u32 2147483647, %v129
    %v132 = vcvt.s32.f32 %v125
    %v133 = vmul.f32 %v132, %v130
    %v134 = vxor.u32 %v133, 2147483648
    %v135 = vsel %vm52, %v134, %v133
    %v136 = vsub.s32 4, %v112
    %v137 = vsel %vm52, %v136, %v112
    %v138 = vsel %vm51, %v24, %v135
    %v139 = vsel %vm51, 0, %v137
    %v140 = vcosq.f32.pop %v138
    %v141 = vsinq.f32.pop %v138
    %vm142 = vweird.f32 %v24
    %v143 = vadd.s32 %v139, 3
    %v144 = vand.u32 %v143, 3
    %vm145 = vcmp.lt.s32.totalorder %v144, 2
    %vm146 = vcmp.eq.s32.totalorder %v144, 0
    %v147 = vxor.u32 %v141, 2147483648
    %v148 = vsel %vm146, %v140, %v147
    %vm149 = vcmp.eq.s32.totalorder %v144, 2
    %v150 = vxor.u32 %v140, 2147483648
    %v151 = vsel %vm149, %v150, %v141
    %v152 = vsel %vm145, %v148, %v151
    %v153 = vsel %vm142, nan, %v152
    %v154 = vand.u32 2147483647, %v25
    %vm155 = vcmp.le.f32.partialorder %v154, 0.7853982
    %vm156 = vcmp.lt.s32.totalorder %v25, 0
    %v157 = vand.u32 %v25, 2139095040
    %v158 = vshrl.u32 %v157, 23
    %v159 = vsub.s32 %v158, 127
    %v160 = vand.u32 2147483647, %v25
    %v161 = vand.u32 %v160, 8388607
    %v162 = vor.u32 %v161, 8388608
    %v163 = vsub.s32 0, %v162
    %v164 = vadd.s32 %v159, 1
    %vm165 = vcmp.gt.s32.totalorder %v164, 0
    %v166 = vsel %vm165, %v164, 0
    %v167 = vshrl.u32 %v166, 5
    %v168 = vand.u32 %v166, 31
    %v169 = vsub.s32 32, %v168
    %v170 = vshrl.u32 683565275, %v169
    %v171 = vshll.u32 683565275, %v168
    %v172 = vshrl.u32 2475754826, %v169
    %v173 = vor.u32 %v171, %v172
    %v174 = vshll.u32 2475754826, %v168
    %v175 = vshrl.u32 2131351028, %v169
    %v176 = vor.u32 %v174, %v175
    %v177 = vshll.u32 2131351028, %v168
    %v178 = vshrl.u32 2102212464, %v169
    %v179 = vor.u32 %v177, %v178
    %v180 = vshll.u32 2102212464, %v168
    %v181 = vshrl.u32 920167782, %v169
    %v182 = vor.u32 %v180, %v181
    %v183 = vshll.u32 920167782, %v168
    %v184 = vshrl.u32 1326507024, %v169
    %v185 = vor.u32 %v183, %v184
    %vm186 = vcmp.lt.s32.totalorder %v167, 1
    %vm187 = vcmp.lt.s32.totalorder %v167, 2
    %vm188 = vcmp.lt.s32.totalorder %v167, 3
    %vm189 = vcmp.lt.s32.totalorder %v167, 4
    %v190 = vsel %vm186, %v170, %v173
    %v191 = vsel %vm189, %v179, 2102212464
    %v192 = vsel %vm188, %v176, %v191
    %v193 = vsel %vm187, %v190, %v192
    %v194 = vsel %vm186, %v173, %v176
    %v195 = vsel %vm189, %v182, 920167782
    %v196 = vsel %vm188, %v179, %v195
    %v197 = vsel %vm187, %v194, %v196
    %v198 = vsel %vm186, %v176, %v179
    %v199 = vsel %vm189, %v185, 1326507024
    %v200 = vsel %vm188, %v182, %v199
    %v201 = vsel %vm187, %v198, %v200
    %v202 = vshll.u32 %v162, 8
    %v203 = vmul.u32.u64.compose %v202, %v201
    %v204 = vextract.low.u32 %v203
    %v205 = vextract.high.u32 %v203
    %v206 = vmul.u32.u64.compose %v202, %v197
    %v207 = vextract.low.u32 %v206
    %v208 = vextract.high.u32 %v206
    %v209 = vmul.u32 %v202, %v193
    %v210 = vadd.s32 %v205, %v207
    %vm211 = vc.u32 %v205, %v207
    %v212 = vadd.s32 %v208, 1
    %v213 = vsel %vm211, %v212, %v208
    %v214 = vadd.s32 %v209, %v213
    %v215 = vadd.s32 %v214, 536870912
    %v216 = vshrl.u32 %v215, 30
    %v217 = vshll.u32 %v216, 30
    %v218 = vsub.s32 %v214, %v217
    %vm219 = vcmp.lt.s32.totalorder %v218, 0
    %v220 = vsub.s32 0, %v218
    %v221 = vsel %vm219, %v220, %v218
    %v222 = vclz %v221
    %v223 = vsub.s32 %v222, 2
    %vm224 = vcmp.gt.s32.totalorder 0, %v223
    %v225 = vsel %vm224, 0, %v223
    %v226 = vsub.s32 32, %v225
    %v227 = vshll.u32 %v218, %v225
    %v228 = vshrl.u32 %v210, %v226
    %v229 = vor.u32 %v227, %v228
    %v230 = vsub.s32 4294967266, %v225
    %v231 = vadd.s32 %v230, 127
    %v232 = vshll.u32 %v231, 23
    %v233 = vor.u32 4788187, %v232
    %v234 = vand.u32 2147483647, %v233
    %v236 = vcvt.s32.f32 %v229
    %v237 = vmul.f32 %v236, %v234
    %v238 = vxor.u32 %v237, 2147483648
    %v239 = vsel %vm156, %v238, %v237
    %v240 = vsub.s32 4, %v216
    %v241 = vsel %vm156, %v240, %v216
    %v242 = vsel %vm155, %v25, %v239
    %v243 = vsel %vm155, 0, %v241
    %v244 = vcosq.f32.pop %v242
    %v245 = vsinq.f32.pop %v242
    %vm246 = vweird.f32 %v25
    %v247 = vadd.s32 %v243, 3
    %v248 = vand.u32 %v247, 3
    %vm249 = vcmp.lt.s32.totalorder %v248, 2
    %vm250 = vcmp.eq.s32.totalorder %v248, 0
    %v251 = vxor.u32 %v245, 2147483648
    %v252 = vsel %vm250, %v244, %v251
    %vm253 = vcmp.eq.s32.totalorder %v248, 2
    %v254 = vxor.u32 %v244, 2147483648
    %v255 = vsel %vm253, %v254, %v245
    %v256 = vsel %vm249, %v252, %v255
    %v257 = vsel %vm246, nan, %v256
    %s258 = sld [smem:[#allocation2 + $0x3]]
    %v259 = vstv %s258
    %v260 = vmul.f32 %v153, %v259
    %v261 = vmul.f32 %v257, %v259
    %v262 = vadd.f32 %v48, %v260
    %v263 = vadd.f32 %v49, %v261
    %264 = vst [vmem:[%s2] sm:$0xff] %v262
    %265 = vst [vmem:[%s2 + $0x8] sm:$0xff] %v263
    // Predicated region
    $region14: #{megactivation.1} parent=1 // pred_check
      _
    $region15: #{megactivation.1} parent=1 // pred_check_branch
      %267 = sbr.rel (0) target = $region17
    $region16: #{megactivation.1} parent=1 // pred_region
      _
    $region17: #{megactivation.1} parent=1 // pred_fallthru
      _
    // Predicated region
    $region18: #{megactivation.1} parent=1 // pred_check
      _
    $region19: #{megactivation.1} parent=1 // pred_check_branch
      %269 = sbr.rel (0) target = $region21
    $region20: #{megactivation.1} parent=1 // pred_region
      _
    $region21: #{megactivation.1} parent=1 // pred_fallthru
      _
    %270 = vsyncpa [#allocation3], 1

</llo_original>
